<compile_context>
chip_gen: v5e
topology: v5e:2x2
jax: 0.10.0
libtpu: 0.0.40
codegen_flags: <defaults>
</compile_context>

<pallas_src>
import functools

import jax
import jax.numpy as jnp
from jax import lax
from jax.experimental import pallas as pl
from jax.experimental.pallas import tpu as pltpu

_LANE = 128   # lane width (last dim)
_ROW = 16     # row quantum: bf16 min sublane tile (also satisfies f32's 8)


def _round_up(n, m):
    return (n + m - 1) // m * m


def _tpu_generation():
    try:
        kind = jax.devices()[0].device_kind.lower()
    except Exception:
        return "unknown"
    for g in ("v7", "v6", "v5"):
        if g in kind:
            return g
    return "unknown"


def _vmem_capacity_bytes():
    try:
        return int(pltpu.get_tpu_info().vmem_capacity_bytes)
    except Exception:
        return (64 << 20) if _tpu_generation() == "v7" else (128 << 20)


# ----------------------------------------------------------------------------
# Kernels
# ----------------------------------------------------------------------------
def _layer_step(x, w, b, s):
    """One highway layer on padded tiles.

    x: [TB, S] f32 carry, w: [S, 3S] bf16 fused weights (gate|nonlinear|linear),
    b: [1, 3S] f32 fused bias. Returns the new [TB, S] f32 carry.
    """
    pre = jnp.dot(x.astype(w.dtype), w, preferred_element_type=jnp.float32) + b
    gate = jax.nn.sigmoid(pre[:, :s])
    nonlinear = jnp.maximum(pre[:, s:2 * s], 0.0)   # f = ReLU
    linear = pre[:, 2 * s:]
    # gate*nl + (1-gate)*lin == gate*(nl - lin) + lin   (one fewer VPU mul)
    return gate * (nonlinear - linear) + linear


def highway_small_kernel(x_ref, w_ref, b_ref, o_ref, *, num_layers):
    """Un-gridded call: everything resident in VMEM, unrolled layer loop."""
    s = o_ref.shape[1]
    x0 = x_ref[...].astype(jnp.float32)

    def body(l, x):
        return _layer_step(x, w_ref[l], b_ref[l], s)

    o_ref[...] = lax.fori_loop(0, num_layers, body, x0,
                               unroll=True).astype(o_ref.dtype)


def highway_grid_kernel(x_ref, w_ref, b_ref, o_ref, carry_ref):
    """(batch_tiles, layers) grid; f32 carry lives in a VMEM scratch."""
    layer = pl.program_id(1)
    s = carry_ref.shape[1]

    # Initialize the f32 carry from the bf16 input block at the first layer of
    # each batch tile (amortized 1/L; keeps later layers free of selects).
    @pl.when(layer == 0)
    def _():
        carry_ref[...] = x_ref[...].astype(jnp.float32)

    new = _layer_step(carry_ref[...], w_ref[...], b_ref[...], s)
    carry_ref[...] = new

    # Write (and cast) the resident output block once, at the last layer; it is
    # DMA'd back to HBM when the batch tile changes.
    @pl.when(layer == pl.num_programs(1) - 1)
    def _():
        o_ref[...] = new.astype(o_ref.dtype)


# ----------------------------------------------------------------------------
# Parameter fusion (call ONCE, outside the hot path)
# ----------------------------------------------------------------------------
def fuse_highway_params(wg, bg, wn, bn, wl, bl, *, weight_dtype=jnp.bfloat16):
    """Pad to lane multiples, cast to weight_dtype, fuse gate|nonlinear|linear.

    Weights in [in, out] layout: [L, S, S]; biases [L, 1, S].
    Doing this per forward call would add ~3*L*S^2*(4+2) B of HBM traffic
    before the kernel starts, so keep the result and reuse it.
    """
    L, S, _ = wg.shape
    Sp = _round_up(S, _LANE)

    def pad_w(w):
        w = w.astype(weight_dtype)
        if Sp == S:
            return w
        return jnp.zeros((L, Sp, Sp), weight_dtype).at[:, :S, :S].set(w)

    def pad_b(b):
        b = b.astype(jnp.float32)
        if Sp == S:
            return b
        return jnp.zeros((L, 1, Sp), jnp.float32).at[:, :, :S].set(b)

    w_fused = jnp.concatenate([pad_w(wg), pad_w(wn), pad_w(wl)], axis=-1)
    b_fused = jnp.concatenate([pad_b(bg), pad_b(bn), pad_b(bl)], axis=-1)
    return w_fused, b_fused


# ----------------------------------------------------------------------------
# Forward
# ----------------------------------------------------------------------------
def highway_forward(x, w_fused, b_fused, *, batch_tile=None, single_step=None):
    """Highway forward.  x: [B, S]; fused params from fuse_highway_params."""
    B, S = x.shape
    L, Sp, Sp3 = w_fused.shape
    assert Sp3 == 3 * Sp and Sp >= S

    out_dtype = x.dtype
    w_bytes = jnp.dtype(w_fused.dtype).itemsize
    out_bytes = jnp.dtype(out_dtype).itemsize

    gen = _tpu_generation()
    # Leave generous headroom for compiler-internal scratch (esp. v7x: 64 MiB).
    vmem_usable = min(int(0.8 * _vmem_capacity_bytes()), 100 << 20)

    Bp = _round_up(max(B, _ROW), _ROW)

    def pad_x(rows):
        xb = x.astype(jnp.bfloat16)          # halve input HBM read + VMEM
        if (rows, Sp) == (B, S):
            return xb
        return jnp.zeros((rows, Sp), jnp.bfloat16).at[:B, :S].set(xb)

    # --- single-step path: no grid, everything resident once in VMEM --------
    resident = (L * Sp * 3 * Sp * w_bytes        # all fused weights
                + L * 3 * Sp * 4                 # all fused biases
                + Bp * Sp * (2 + out_bytes + 4)  # x (bf16), out, f32 carry
                + Bp * 3 * Sp * 4                # fused pre-activation
                + (1 << 20))
    if single_step is None:
        single_step = resident <= min(int(0.45 * vmem_usable), 40 << 20)

    if single_step:
        x_p = pad_x(Bp)
        vmem_limit = int(min(max(resident + (8 << 20), 32 << 20), vmem_usable))
        out = pl.pallas_call(
            functools.partial(highway_small_kernel, num_layers=L),
            out_shape=jax.ShapeDtypeStruct((Bp, Sp), out_dtype),
            compiler_params=pltpu.CompilerParams(vmem_limit_bytes=vmem_limit),
        )(x_p, w_fused, b_fused)
        return out[:B, :S]

    # --- general path: (batch_tiles, layers) grid, carry in VMEM scratch ----
    if batch_tile is None:
        # Per layer step the fresh DMA is the fused weight (Sp*3Sp*2 B) while
        # compute is 2*TB*Sp*3Sp flops -> intensity per weight byte ~= TB.
        # Roofline ratios ~240 (v5e) / ~640 (v6e) / ~310 (v7x).
        batch_tile = 1024 if gen == "v6" else 512

    TB = min(Bp, _round_up(batch_tile, _ROW))
    # v7x: make sure the "parallel" batch axis has >= 2 tiles so both
    # TensorCores get work.
    if gen == "v7" and Bp <= TB and Bp >= 2 * _ROW:
        TB = _round_up((Bp + 1) // 2, _ROW)

    def grid_vmem(tb):
        return (2 * (Sp * 3 * Sp * w_bytes + 3 * Sp * 4)  # W, b double-buffered
                + 2 * tb * Sp * 2                          # x blocks (bf16)
                + 2 * tb * Sp * out_bytes                  # out blocks
                + tb * Sp * 4                              # f32 carry scratch
                + tb * 3 * Sp * 4                          # pre-activations
                + (2 << 20))

    # Shrink the batch tile only if the estimate does not fit usable VMEM.
    while TB > _ROW and grid_vmem(TB) > vmem_usable:
        TB = _round_up(TB // 2, _ROW)

    Bp = _round_up(Bp, TB)
    n_btiles = Bp // TB
    x_p = pad_x(Bp)

    # Always set the scoped-VMEM limit (v5e default is only 16 MiB); never set
    # it below 32 MiB or above ~0.8 of physical VMEM.
    vmem_limit = int(min(max(grid_vmem(TB) + (8 << 20), 32 << 20), vmem_usable))

    out = pl.pallas_call(
        highway_grid_kernel,
        out_shape=jax.ShapeDtypeStruct((Bp, Sp), out_dtype),
        grid_spec=pltpu.PrefetchScalarGridSpec(
            num_scalar_prefetch=0,
            # Layer axis MUST stay innermost so the scratch carry is valid per
            # batch tile; the batch axis is parallel (megacore / 2nd TC).
            grid=(n_btiles, L),
            in_specs=[pl.BlockSpec((TB, Sp), lambda i, l: (i, 0)),
                      pl.BlockSpec((None, Sp, 3 * Sp), lambda i, l: (l, 0, 0)),
                      pl.BlockSpec((None, 1, 3 * Sp), lambda i, l: (l, 0, 0))],
            out_specs=pl.BlockSpec((TB, Sp), lambda i, l: (i, 0)),
            scratch_shapes=[pltpu.VMEM((TB, Sp), jnp.float32)],
        ),
        compiler_params=pltpu.CompilerParams(
            dimension_semantics=("parallel", "arbitrary"),
            vmem_limit_bytes=vmem_limit),
    )(x_p, w_fused, b_fused)
    return out[:B, :S]


# ----------------------------------------------------------------------------
# Reference + init
# ----------------------------------------------------------------------------
def init_params(key, num_layers, size):
    """Deterministic PyTorch-Linear-style init: U(-1/sqrt(size), 1/sqrt(size))."""
    bound = 1.0 / jnp.sqrt(jnp.float32(size))
    keys = jax.random.split(key, 6)

    def uni(k, shape):
        return jax.random.uniform(k, shape, jnp.float32, -bound, bound)

    # PyTorch Linear weight is [out, in]; kernel wants [in, out], so transpose.
    wg = jnp.swapaxes(uni(keys[0], (num_layers, size, size)), -1, -2)
    wn = jnp.swapaxes(uni(keys[1], (num_layers, size, size)), -1, -2)
    wl = jnp.swapaxes(uni(keys[2], (num_layers, size, size)), -1, -2)
    bg = uni(keys[3], (num_layers, 1, size))
    bn = uni(keys[4], (num_layers, 1, size))
    bl = uni(keys[5], (num_layers, 1, size))
    return wg, bg, wn, bn, wl, bl


def highway_ref(x, wg, bg, wn, bn, wl, bl, weight_dtype=jnp.bfloat16):
    """Pure-JAX reference matching the PyTorch forward (same bf16 matmul dtype)."""
    x = x.astype(jnp.float32)
    for l in range(wg.shape[0]):
        def proj(w, b):
            return (jnp.dot(x.astype(weight_dtype), w[l].astype(weight_dtype),
                            preferred_element_type=jnp.float32)
                    + b[l].astype(jnp.float32))
        gate = jax.nn.sigmoid(proj(wg, bg))
        nonlinear = jnp.maximum(proj(wn, bn), 0.0)
        linear = proj(wl, bl)
        x = gate * nonlinear + (1.0 - gate) * linear
    return x


if __name__ == "__main__":
    key = jax.random.PRNGKey(0)
    k_x, k_p, k_x2, k_p2 = jax.random.split(key, 4)

    # --- tiny config (typical module usage; exercises the single-step path) --
    batch, size, num_layers = 8, 32, 2
    x = jax.random.normal(k_x, (batch, size), jnp.float32)
    raw = init_params(k_p, num_layers, size)
    w_fused, b_fused = fuse_highway_params(*raw)      # fused ONCE, reused

    out = jax.block_until_ready(highway_forward(x, w_fused, b_fused))
    ref = highway_ref(x, *raw)
    assert out.shape == (batch, size)
    assert jnp.allclose(out, ref, atol=2e-3, rtol=2e-3), "tiny config mismatch"

    # --- larger config (exercises the batch-tiled, per-layer pipelined grid) --
    batch2, size2, layers2 = 300, 256, 3
    x2 = jax.random.normal(k_x2, (batch2, size2), jnp.float32)
    raw2 = init_params(k_p2, layers2, size2)
    w_fused2, b_fused2 = fuse_highway_params(*raw2)

    out2 = jax.block_until_ready(
        highway_forward(x2, w_fused2, b_fused2, single_step=False))
    ref2 = highway_ref(x2, *raw2)
    assert out2.shape == (batch2, size2)
    assert jnp.allclose(out2, ref2, atol=2e-3, rtol=2e-3), "grid config mismatch"

    print("KERNEL_OK")
</pallas_src>

<mosaic_0001>
module attributes {stable_mosaic.version = 11 : i64} {
  func.func @highway_small_kernel(%arg0: memref<16x128xbf16, #tpu.memory_space<vmem>>, %arg1: memref<2x128x384xbf16, #tpu.memory_space<vmem>>, %arg2: memref<2x1x384xf32, #tpu.memory_space<vmem>>, %arg3: memref<16x128xf32, #tpu.memory_space<vmem>>) attributes {dimension_semantics = [], scalar_prefetch = 0 : i64, scratch_operands = 0 : i64, tpu.core_type = #tpu.core_type<tc>} {
    %c0 = arith.constant 0 : index
    %c0_0 = arith.constant 0 : index
    %0 = vector.load %arg0[%c0, %c0_0] : memref<16x128xbf16, #tpu.memory_space<vmem>>, vector<16x128xbf16>
    %1 = arith.extf %0 : vector<16x128xbf16> to vector<16x128xf32>
    %c0_i32 = arith.constant 0 : i32
    %2 = arith.index_cast %c0_i32 : i32 to index
    %c0_1 = arith.constant 0 : index
    %c0_2 = arith.constant 0 : index
    %3 = vector.load %arg1[%2, %c0_1, %c0_2] : memref<2x128x384xbf16, #tpu.memory_space<vmem>>, vector<1x128x384xbf16>
    %4 = vector.shape_cast %3 : vector<1x128x384xbf16> to vector<128x384xbf16>
    %5 = arith.index_cast %c0_i32 : i32 to index
    %c0_3 = arith.constant 0 : index
    %c0_4 = arith.constant 0 : index
    %6 = vector.load %arg2[%5, %c0_3, %c0_4] : memref<2x1x384xf32, #tpu.memory_space<vmem>>, vector<1x1x384xf32>
    %7 = vector.shape_cast %6 : vector<1x1x384xf32> to vector<1x384xf32>
    %8 = arith.truncf %1 : vector<16x128xf32> to vector<16x128xbf16>
    %cst = arith.constant dense<0.000000e+00> : vector<16x384xf32>
    %9 = tpu.matmul %8, %4, %cst {dimension_numbers = #tpu.dot_dimension_numbers<[1], [0], [0], [1], [0, 0, 1, 1], [], []>} : vector<16x128xbf16>, vector<128x384xbf16>, vector<16x384xf32> -> vector<16x384xf32>
    %10 = vector.broadcast %7 : vector<1x384xf32> to vector<16x384xf32>
    %11 = arith.addf %9, %10 : vector<16x384xf32>
    %12 = vector.extract_strided_slice %11 {offsets = [0, 0], sizes = [16, 128], strides = [1, 1]} : vector<16x384xf32> to vector<16x128xf32>
    %13 = arith.negf %12 : vector<16x128xf32>
    %14 = math.exp %13 : vector<16x128xf32>
    %cst_5 = arith.constant 1.000000e+00 : f32
    %15 = vector.broadcast %cst_5 : f32 to vector<16x128xf32>
    %16 = arith.addf %15, %14 : vector<16x128xf32>
    %17 = arith.divf %15, %16 : vector<16x128xf32>
    %18 = vector.extract_strided_slice %11 {offsets = [0, 128], sizes = [16, 128], strides = [1, 1]} : vector<16x384xf32> to vector<16x128xf32>
    %cst_6 = arith.constant 0.000000e+00 : f32
    %19 = vector.broadcast %cst_6 : f32 to vector<16x128xf32>
    %20 = arith.maximumf %18, %19 : vector<16x128xf32>
    %21 = vector.extract_strided_slice %11 {offsets = [0, 256], sizes = [16, 128], strides = [1, 1]} : vector<16x384xf32> to vector<16x128xf32>
    %22 = arith.subf %20, %21 : vector<16x128xf32>
    %23 = arith.mulf %17, %22 : vector<16x128xf32>
    %24 = arith.addf %23, %21 : vector<16x128xf32>
    %c1_i32 = arith.constant 1 : i32
    %25 = arith.index_cast %c1_i32 : i32 to index
    %c0_7 = arith.constant 0 : index
    %c0_8 = arith.constant 0 : index
    %26 = vector.load %arg1[%25, %c0_7, %c0_8] : memref<2x128x384xbf16, #tpu.memory_space<vmem>>, vector<1x128x384xbf16>
    %27 = vector.shape_cast %26 : vector<1x128x384xbf16> to vector<128x384xbf16>
    %28 = arith.index_cast %c1_i32 : i32 to index
    %c0_9 = arith.constant 0 : index
    %c0_10 = arith.constant 0 : index
    %29 = vector.load %arg2[%28, %c0_9, %c0_10] : memref<2x1x384xf32, #tpu.memory_space<vmem>>, vector<1x1x384xf32>
    %30 = vector.shape_cast %29 : vector<1x1x384xf32> to vector<1x384xf32>
    %31 = arith.truncf %24 : vector<16x128xf32> to vector<16x128xbf16>
    %cst_11 = arith.constant dense<0.000000e+00> : vector<16x384xf32>
    %32 = tpu.matmul %31, %27, %cst_11 {dimension_numbers = #tpu.dot_dimension_numbers<[1], [0], [0], [1], [0, 0, 1, 1], [], []>} : vector<16x128xbf16>, vector<128x384xbf16>, vector<16x384xf32> -> vector<16x384xf32>
    %33 = vector.broadcast %30 : vector<1x384xf32> to vector<16x384xf32>
    %34 = arith.addf %32, %33 : vector<16x384xf32>
    %35 = vector.extract_strided_slice %34 {offsets = [0, 0], sizes = [16, 128], strides = [1, 1]} : vector<16x384xf32> to vector<16x128xf32>
    %36 = arith.negf %35 : vector<16x128xf32>
    %37 = math.exp %36 : vector<16x128xf32>
    %cst_12 = arith.constant 1.000000e+00 : f32
    %38 = vector.broadcast %cst_12 : f32 to vector<16x128xf32>
    %39 = arith.addf %38, %37 : vector<16x128xf32>
    %40 = arith.divf %38, %39 : vector<16x128xf32>
    %41 = vector.extract_strided_slice %34 {offsets = [0, 128], sizes = [16, 128], strides = [1, 1]} : vector<16x384xf32> to vector<16x128xf32>
    %cst_13 = arith.constant 0.000000e+00 : f32
    %42 = vector.broadcast %cst_13 : f32 to vector<16x128xf32>
    %43 = arith.maximumf %41, %42 : vector<16x128xf32>
    %44 = vector.extract_strided_slice %34 {offsets = [0, 256], sizes = [16, 128], strides = [1, 1]} : vector<16x384xf32> to vector<16x128xf32>
    %45 = arith.subf %43, %44 : vector<16x128xf32>
    %46 = arith.mulf %40, %45 : vector<16x128xf32>
    %47 = arith.addf %46, %44 : vector<16x128xf32>
    %c2_i32 = arith.constant 2 : i32
    %c0_14 = arith.constant 0 : index
    %c0_15 = arith.constant 0 : index
    %48 = vector.load %arg3[%c0_14, %c0_15] : memref<16x128xf32, #tpu.memory_space<vmem>>, vector<16x128xf32>
    tpu.vector_store %arg3[%c0_14, %c0_15], %47 {strides = array<i32>} : memref<16x128xf32, #tpu.memory_space<vmem>>, vector<16x128xf32>,
    return
  }
}

</mosaic_0001>

<llo_original>
// kernel: tpu_custom_call.1
$region0: #{tpu_custom_call.1}
  #allocation0 [shape = 'u32[]', space=smem, size = 0x4, offset = 0x4, fixed_abs, tag = 'smem constant byte address 0x4 - core index']
  #allocation1 [shape = 'u32[72,128]{1,0:T(1,128)}', space=vmem, size = 0x9000, scoped, tag = 'internal scratch']
  %s0 = inlined_call_operand.hbm [shape: bf16[16,128], index: 0, kind: input, shape index: {}]
  %s1 = inlined_call_operand.hbm [shape: bf16[2,128,384], index: 1, kind: input, shape index: {}]
  %s2 = inlined_call_operand.hbm [shape: f32[2,1,384], index: 2, kind: input, shape index: {}]
  %s3 = inlined_call_operand.hbm [shape: f32[16,128], index: 3, kind: output, shape index: {}]
  %s4 = sld [smem:[#allocation0]]
  $region34: #{tpu_custom_call.1} parent=0
    _
  %s6 = ssub.s32 1, %s4
  %s7 = scalar_select 0, %s6, %s4
  $region1: #{tpu_custom_call.1} parent=0
    #allocation2 [shape = 'u8[4096]{0}', space=vmem, size = 0x1000, scoped, tag = 'input window, operand 0, single buffered']
    #allocation3 [shape = 's32[1]{0}', space=sflag, size = 0x4, scoped, tag = 'scoped memory for tpu_custom_call.1']
    #allocation4 [shape = 's32[1]{0}', space=sflag, size = 0x4, scoped, tag = 'scoped memory for tpu_custom_call.1']
    #allocation5 [shape = 'u8[196608]{0}', space=vmem, size = 0x30000, scoped, tag = 'input window, operand 1, single buffered']
    #allocation6 [shape = 's32[1]{0}', space=sflag, size = 0x4, scoped, tag = 'scoped memory for tpu_custom_call.1']
    #allocation7 [shape = 'u8[3072]{0}', space=vmem, size = 0xc00, scoped, tag = 'input window, operand 2, single buffered']
    #allocation8 [shape = 'u8[8192]{0}', space=vmem, size = 0x2000, scoped, tag = 'output window, operand 0, single buffered']
    %8 = vsyncpa [#allocation3], 0
    %9 = vsyncpa [#allocation6], 0
    %10 = vsyncpa [#allocation4], 0
    // Predicated region
    $region2: #{tpu_custom_call.1} parent=1 // pred_check
      _
    $region3: #{tpu_custom_call.1} parent=1 // pred_check_branch
      %12 = sbr.rel (0) target = $region5
    $region4: #{tpu_custom_call.1} parent=1 // pred_region
      %14 = vsyncadd [#allocation3], 0
      %s15 = sshll.u32 %s0, 4
      %s16 = int_to_ptr.hbm [resolvable:$true] %s15
      %s17 = sshll.u32 [#allocation2], 4
      %s18 = int_to_ptr.vmem [resolvable:$true] %s17
      %23 = dma.hbm_to_vmem [thread:$0]  %s16, 128, %s18, [#allocation3], 64, 64, 4
    $region5: #{tpu_custom_call.1} parent=1 // pred_fallthru
      _
    // Predicated region
    $region6: #{tpu_custom_call.1} parent=1 // pred_check
      _
    $region7: #{tpu_custom_call.1} parent=1 // pred_check_branch
      %25 = sbr.rel (0) target = $region9
    $region8: #{tpu_custom_call.1} parent=1 // pred_region
      %27 = vsyncadd [#allocation6], 0
      %s28 = sshll.u32 %s1, 4
      %s29 = int_to_ptr.hbm [resolvable:$true] %s28
      %s30 = sshll.u32 [#allocation5], 4
      %s31 = int_to_ptr.vmem [resolvable:$true] %s30
      %36 = dma.hbm_to_vmem [thread:$0]  %s29, 6144, %s31, [#allocation6], 192, 192, 12
    $region9: #{tpu_custom_call.1} parent=1 // pred_fallthru
      _
    // Predicated region
    $region10: #{tpu_custom_call.1} parent=1 // pred_check
      _
    $region11: #{tpu_custom_call.1} parent=1 // pred_check_branch
      %38 = sbr.rel (0) target = $region13
    $region12: #{tpu_custom_call.1} parent=1 // pred_region
      %40 = vsyncadd [#allocation6], 0
      %s41 = sshll.u32 %s2, 4
      %s42 = int_to_ptr.hbm [resolvable:$true] %s41
      %s43 = sshll.u32 [#allocation7], 4
      %s44 = int_to_ptr.vmem [resolvable:$true] %s43
      %49 = dma.hbm_to_vmem [thread:$0]  %s42, 96, %s44, [#allocation6], 48, 48, 3
    $region13: #{tpu_custom_call.1} parent=1 // pred_fallthru
      _
    // Predicated region
    $region14: #{tpu_custom_call.1} parent=1 // pred_check
      _
    $region15: #{tpu_custom_call.1} parent=1 // pred_check_branch
      %51 = sbr.rel (0) target = $region17
    $region16: #{tpu_custom_call.1} parent=1 // pred_region
      %53 = dma.done [#allocation3], 128
    $region17: #{tpu_custom_call.1} parent=1 // pred_fallthru
      _
    // Predicated region
    $region18: #{tpu_custom_call.1} parent=1 // pred_check
      _
    $region19: #{tpu_custom_call.1} parent=1 // pred_check_branch
      %55 = sbr.rel (0) target = $region21
    $region20: #{tpu_custom_call.1} parent=1 // pred_region
      %57 = dma.done [#allocation6], 6144
    $region21: #{tpu_custom_call.1} parent=1 // pred_fallthru
      _
    // Predicated region
    $region22: #{tpu_custom_call.1} parent=1 // pred_check
      _
    $region23: #{tpu_custom_call.1} parent=1 // pred_check_branch
      %59 = sbr.rel (0) target = $region25
    $region24: #{tpu_custom_call.1} parent=1 // pred_region
      %61 = dma.done [#allocation6], 96
    $region25: #{tpu_custom_call.1} parent=1 // pred_fallthru
      _
    %v62 = vld [vmem:[#allocation2] sm:$0xf]
    %v63 = vld [vmem:[#allocation2 + $0x4] sm:$0xf]
    %v64 = vld [vmem:[#allocation5] sm:$0xff]
    %v65 = vld [vmem:[#allocation5 + $0x8] sm:$0xf]
    %v66 = vld [vmem:[#allocation5 + $0xc] sm:$0xff]
    %v67 = vld [vmem:[#allocation5 + $0x14] sm:$0xf]
    %v68 = vld [vmem:[#allocation5 + $0x18] sm:$0xff]
    %v69 = vld [vmem:[#allocation5 + $0x20] sm:$0xf]
    %v70 = vld [vmem:[#allocation5 + $0x24] sm:$0xff]
    %v71 = vld [vmem:[#allocation5 + $0x2c] sm:$0xf]
    %v72 = vld [vmem:[#allocation5 + $0x30] sm:$0xff]
    %v73 = vld [vmem:[#allocation5 + $0x38] sm:$0xf]
    %v74 = vld [vmem:[#allocation5 + $0x3c] sm:$0xff]
    %v75 = vld [vmem:[#allocation5 + $0x44] sm:$0xf]
    %v76 = vld [vmem:[#allocation5 + $0x48] sm:$0xff]
    %v77 = vld [vmem:[#allocation5 + $0x50] sm:$0xf]
    %v78 = vld [vmem:[#allocation5 + $0x54] sm:$0xff]
    %v79 = vld [vmem:[#allocation5 + $0x5c] sm:$0xf]
    %v80 = vld [vmem:[#allocation5 + $0x60] sm:$0xff]
    %v81 = vld [vmem:[#allocation5 + $0x68] sm:$0xf]
    %v82 = vld [vmem:[#allocation5 + $0x6c] sm:$0xff]
    %v83 = vld [vmem:[#allocation5 + $0x74] sm:$0xf]
    %v84 = vld [vmem:[#allocation5 + $0x78] sm:$0xff]
    %v85 = vld [vmem:[#allocation5 + $0x80] sm:$0xf]
    %v86 = vld [vmem:[#allocation5 + $0x84] sm:$0xff]
    %v87 = vld [vmem:[#allocation5 + $0x8c] sm:$0xf]
    %v88 = vld [vmem:[#allocation5 + $0x90] sm:$0xff]
    %v89 = vld [vmem:[#allocation5 + $0x98] sm:$0xf]
    %v90 = vld [vmem:[#allocation5 + $0x9c] sm:$0xff]
    %v91 = vld [vmem:[#allocation5 + $0xa4] sm:$0xf]
    %v92 = vld [vmem:[#allocation5 + $0xa8] sm:$0xff]
    %v93 = vld [vmem:[#allocation5 + $0xb0] sm:$0xf]
    %v94 = vld [vmem:[#allocation5 + $0xb4] sm:$0xff]
    %v95 = vld [vmem:[#allocation5 + $0xbc] sm:$0xf]
    %v96 = vld [vmem:[#allocation7] sm:$0x7]
    %v98 = vperm.slane %v96, 0
    %v99 = vperm.slane %v96, 1
    %v100 = vperm.slane %v96, 2
    %v106 = vunpack.c.l.b16 %v62
    %v107 = vunpack.c.l.b16 %v63
    %v108 = vpack.c.b16 %v107, %v106
    %v142 = vunpack.c.l.b16 %v64
    %v143 = vunpack.c.h.b16 %v64
    %v144 = vunpack.c.l.b16 %v65
    %v145 = vunpack.c.l.b16 %v66
    %v146 = vunpack.c.h.b16 %v66
    %v147 = vunpack.c.l.b16 %v67
    %v148 = vunpack.c.l.b16 %v68
    %v149 = vunpack.c.h.b16 %v68
    %v150 = vunpack.c.l.b16 %v69
    %v151 = vunpack.c.l.b16 %v70
    %v152 = vunpack.c.h.b16 %v70
    %v153 = vunpack.c.l.b16 %v71
    %v154 = vunpack.c.l.b16 %v72
    %v155 = vunpack.c.h.b16 %v72
    %v156 = vunpack.c.l.b16 %v73
    %v157 = vunpack.c.l.b16 %v74
    %v158 = vunpack.c.h.b16 %v74
    %v159 = vunpack.c.l.b16 %v75
    %v160 = vunpack.c.l.b16 %v76
    %v161 = vunpack.c.h.b16 %v76
    %v162 = vunpack.c.l.b16 %v77
    %v163 = vunpack.c.l.b16 %v78
    %v164 = vunpack.c.h.b16 %v78
    %v165 = vunpack.c.l.b16 %v79
    %v166 = vunpack.c.l.b16 %v80
    %v167 = vunpack.c.h.b16 %v80
    %v168 = vunpack.c.l.b16 %v81
    %v169 = vunpack.c.l.b16 %v82
    %v170 = vunpack.c.h.b16 %v82
    %v171 = vunpack.c.l.b16 %v83
    %v172 = vunpack.c.l.b16 %v84
    %v173 = vunpack.c.h.b16 %v84
    %v174 = vunpack.c.l.b16 %v85
    %v175 = vunpack.c.l.b16 %v86
    %v176 = vunpack.c.h.b16 %v86
    %v177 = vunpack.c.l.b16 %v87
    %v178 = vunpack.c.l.b16 %v88
    %v179 = vunpack.c.h.b16 %v88
    %v180 = vunpack.c.l.b16 %v89
    %v181 = vunpack.c.l.b16 %v90
    %v182 = vunpack.c.h.b16 %v90
    %v183 = vunpack.c.l.b16 %v91
    %v184 = vunpack.c.l.b16 %v92
    %v185 = vunpack.c.h.b16 %v92
    %v186 = vunpack.c.l.b16 %v93
    %v187 = vunpack.c.l.b16 %v94
    %v188 = vunpack.c.h.b16 %v94
    %v189 = vunpack.c.l.b16 %v95
    %v190 = vpack.c.b16 %v145, %v142
    %v191 = vpack.c.b16 %v146, %v143
    %v192 = vpack.c.b16 %v147, %v144
    %v193 = vpack.c.b16 %v151, %v148
    %v194 = vpack.c.b16 %v152, %v149
    %v195 = vpack.c.b16 %v153, %v150
    %v196 = vpack.c.b16 %v157, %v154
    %v197 = vpack.c.b16 %v158, %v155
    %v198 = vpack.c.b16 %v159, %v156
    %v199 = vpack.c.b16 %v163, %v160
    %v200 = vpack.c.b16 %v164, %v161
    %v201 = vpack.c.b16 %v165, %v162
    %v202 = vpack.c.b16 %v169, %v166
    %v203 = vpack.c.b16 %v170, %v167
    %v204 = vpack.c.b16 %v171, %v168
    %v205 = vpack.c.b16 %v175, %v172
    %v206 = vpack.c.b16 %v176, %v173
    %v207 = vpack.c.b16 %v177, %v174
    %v208 = vpack.c.b16 %v181, %v178
    %v209 = vpack.c.b16 %v182, %v179
    %v210 = vpack.c.b16 %v183, %v180
    %v211 = vpack.c.b16 %v187, %v184
    %v212 = vpack.c.b16 %v188, %v185
    %v213 = vpack.c.b16 %v189, %v186
    %238 = vmatpush.bf16.msra.mxu0 %v211
    %239 = vmatpush.bf16.msra.mxu0 %v208
    %240 = vmatpush.bf16.msra.mxu0 %v205
    %241 = vmatpush.bf16.msra.mxu0 %v202
    %242 = vmatpush.bf16.msra.mxu0 %v199
    %243 = vmatpush.bf16.msra.mxu0 %v196
    %244 = vmatpush.bf16.msra.mxu0 %v193
    %245 = vmatpush.bf16.msra.mxu0 %v190
    %246 = vmatmul.bf16.gmra.mxu0 %v108
    %v247 = vpop.f32.mrf.mxu0
    %v248 = vadd.f32 %v98, %v247
    %v249 = vpop.f32.mrf.mxu0
    %v250 = vadd.f32 %v98, %v249
    %251 = vdwg.mxu0
    %252 = vmatpush.bf16.msra.mxu0 %v212
    %253 = vmatpush.bf16.msra.mxu0 %v209
    %254 = vmatpush.bf16.msra.mxu0 %v206
    %255 = vmatpush.bf16.msra.mxu0 %v203
    %256 = vmatpush.bf16.msra.mxu0 %v200
    %257 = vmatpush.bf16.msra.mxu0 %v197
    %258 = vmatpush.bf16.msra.mxu0 %v194
    %259 = vmatpush.bf16.msra.mxu0 %v191
    %260 = vmatmul.bf16.gmra.mxu0 %v108
    %v261 = vpop.f32.mrf.mxu0
    %v262 = vadd.f32 %v99, %v261
    %v263 = vpop.f32.mrf.mxu0
    %v264 = vadd.f32 %v99, %v263
    %265 = vdwg.mxu0
    %266 = vmatpush.bf16.msra.mxu0 %v213
    %267 = vmatpush.bf16.msra.mxu0 %v210
    %268 = vmatpush.bf16.msra.mxu0 %v207
    %269 = vmatpush.bf16.msra.mxu0 %v204
    %270 = vmatpush.bf16.msra.mxu0 %v201
    %271 = vmatpush.bf16.msra.mxu0 %v198
    %272 = vmatpush.bf16.msra.mxu0 %v195
    %273 = vmatpush.bf16.msra.mxu0 %v192
    %274 = vmatmul.bf16.gmra.mxu0 %v108
    %v275 = vpop.f32.mrf.mxu0
    %v276 = vadd.f32 %v100, %v275
    %v277 = vpop.f32.mrf.mxu0
    %v278 = vadd.f32 %v100, %v277
    %279 = vdwg.mxu0
    %v280 = vxor.u32 %v248, 2147483648
    %v281 = vxor.u32 %v250, 2147483648
    %v282 = vmul.f32 %v280, 1.442695
    %v283 = vpow.pop %v282
    %v284 = vmul.f32 %v281, 1.442695
    %v285 = vpow.pop %v284
    %v286 = vadd.f32 %v283, 1.0
    %v287 = vadd.f32 %v285, 1.0
    %v288 = vrcp.pop %v286
    %v289 = vmul.f32 %v286, %v288
    %v290 = vsub.f32 1.0, %v289
    %v291 = vmul.f32 %v288, %v290
    %v292 = vadd.f32 %v288, %v291
    %vm293 = vweird.f32 %v286
    %vm294 = vweird.f32 %v288
    %vm295 = vmor %vm293, %vm294
    %v296 = vsel %vm295, %v288, %v292
    %v297 = vand.u32 2147483647, %v286
    %vm298 = vcmp.eq.f32.partialorder %v297, 8.507059e+37
    %v299 = vand.u32 %v286, 2147483648
    %v300 = vor.u32 1.1754944e-38, %v299
    %v301 = vsel %vm298, %v300, %v296
    %v302 = vmul.f32 1.0, %v301
    %v303 = vrcp.pop %v287
    %v304 = vmul.f32 %v287, %v303
    %v305 = vsub.f32 1.0, %v304
    %v306 = vmul.f32 %v303, %v305
    %v307 = vadd.f32 %v303, %v306
    %vm308 = vweird.f32 %v287
    %vm309 = vweird.f32 %v303
    %vm310 = vmor %vm308, %vm309
    %v311 = vsel %vm310, %v303, %v307
    %v312 = vand.u32 2147483647, %v287
    %vm313 = vcmp.eq.f32.partialorder %v312, 8.507059e+37
    %v314 = vand.u32 %v287, 2147483648
    %v315 = vor.u32 1.1754944e-38, %v314
    %v316 = vsel %vm313, %v315, %v311
    %v317 = vmul.f32 1.0, %v316
    %v318 = vmax.f32 %v262, 0.0
    %v319 = vmax.f32 %v264, 0.0
    %v320 = vsub.f32 %v318, %v276
    %v321 = vsub.f32 %v319, %v278
    %v322 = vmul.f32 %v302, %v320
    %v323 = vmul.f32 %v317, %v321
    %v324 = vadd.f32 %v322, %v276
    %v325 = vadd.f32 %v323, %v278
    %s326 = scalar_lea.vmem [#allocation5], 192
    %v327 = vld [vmem:[%s326] sm:$0xff]
    %v328 = vld [vmem:[%s326 + $0x8] sm:$0xf]
    %v329 = vld [vmem:[%s326 + $0xc] sm:$0xff]
    %v330 = vld [vmem:[%s326 + $0x14] sm:$0xf]
    %v331 = vld [vmem:[%s326 + $0x18] sm:$0xff]
    %v332 = vld [vmem:[%s326 + $0x20] sm:$0xf]
    %v333 = vld [vmem:[%s326 + $0x24] sm:$0xff]
    %v334 = vld [vmem:[%s326 + $0x2c] sm:$0xf]
    %v335 = vld [vmem:[%s326 + $0x30] sm:$0xff]
    %v336 = vld [vmem:[%s326 + $0x38] sm:$0xf]
    %v337 = vld [vmem:[%s326 + $0x3c] sm:$0xff]
    %v338 = vld [vmem:[%s326 + $0x44] sm:$0xf]
    %v339 = vld [vmem:[%s326 + $0x48] sm:$0xff]
    %v340 = vld [vmem:[%s326 + $0x50] sm:$0xf]
    %v341 = vld [vmem:[%s326 + $0x54] sm:$0xff]
    %v342 = vld [vmem:[%s326 + $0x5c] sm:$0xf]
    %v343 = vld [vmem:[%s326 + $0x60] sm:$0xff]
    %v344 = vld [vmem:[%s326 + $0x68] sm:$0xf]
    %v345 = vld [vmem:[%s326 + $0x6c] sm:$0xff]
    %v346 = vld [vmem:[%s326 + $0x74] sm:$0xf]
    %v347 = vld [vmem:[%s326 + $0x78] sm:$0xff]
    %v348 = vld [vmem:[%s326 + $0x80] sm:$0xf]
    %v349 = vld [vmem:[%s326 + $0x84] sm:$0xff]
    %v350 = vld [vmem:[%s326 + $0x8c] sm:$0xf]
    %v351 = vld [vmem:[%s326 + $0x90] sm:$0xff]
    %v352 = vld [vmem:[%s326 + $0x98] sm:$0xf]
    %v353 = vld [vmem:[%s326 + $0x9c] sm:$0xff]
    %v354 = vld [vmem:[%s326 + $0xa4] sm:$0xf]
    %v355 = vld [vmem:[%s326 + $0xa8] sm:$0xff]
    %v356 = vld [vmem:[%s326 + $0xb0] sm:$0xf]
    %v357 = vld [vmem:[%s326 + $0xb4] sm:$0xff]
    %v358 = vld [vmem:[%s326 + $0xbc] sm:$0xf]
    %s359 = scalar_lea.vmem [#allocation7], 3
    %v360 = vld [vmem:[%s359] sm:$0x7]
    %v361 = vpack.c.bf16 %v325, %v324
    %v363 = vperm.slane %v360, 0
    %v364 = vperm.slane %v360, 1
    %v365 = vperm.slane %v360, 2
    %v401 = vunpack.c.l.b16 %v327
    %v402 = vunpack.c.h.b16 %v327
    %v403 = vunpack.c.l.b16 %v328
    %v404 = vunpack.c.l.b16 %v329
    %v405 = vunpack.c.h.b16 %v329
    %v406 = vunpack.c.l.b16 %v330
    %v407 = vunpack.c.l.b16 %v331
    %v408 = vunpack.c.h.b16 %v331
    %v409 = vunpack.c.l.b16 %v332
    %v410 = vunpack.c.l.b16 %v333
    %v411 = vunpack.c.h.b16 %v333
    %v412 = vunpack.c.l.b16 %v334
    %v413 = vunpack.c.l.b16 %v335
    %v414 = vunpack.c.h.b16 %v335
    %v415 = vunpack.c.l.b16 %v336
    %v416 = vunpack.c.l.b16 %v337
    %v417 = vunpack.c.h.b16 %v337
    %v418 = vunpack.c.l.b16 %v338
    %v419 = vunpack.c.l.b16 %v339
    %v420 = vunpack.c.h.b16 %v339
    %v421 = vunpack.c.l.b16 %v340
    %v422 = vunpack.c.l.b16 %v341
    %v423 = vunpack.c.h.b16 %v341
    %v424 = vunpack.c.l.b16 %v342
    %v425 = vunpack.c.l.b16 %v343
    %v426 = vunpack.c.h.b16 %v343
    %v427 = vunpack.c.l.b16 %v344
    %v428 = vunpack.c.l.b16 %v345
    %v429 = vunpack.c.h.b16 %v345
    %v430 = vunpack.c.l.b16 %v346
    %v431 = vunpack.c.l.b16 %v347
    %v432 = vunpack.c.h.b16 %v347
    %v433 = vunpack.c.l.b16 %v348
    %v434 = vunpack.c.l.b16 %v349
    %v435 = vunpack.c.h.b16 %v349
    %v436 = vunpack.c.l.b16 %v350
    %v437 = vunpack.c.l.b16 %v351
    %v438 = vunpack.c.h.b16 %v351
    %v439 = vunpack.c.l.b16 %v352
    %v440 = vunpack.c.l.b16 %v353
    %v441 = vunpack.c.h.b16 %v353
    %v442 = vunpack.c.l.b16 %v354
    %v443 = vunpack.c.l.b16 %v355
    %v444 = vunpack.c.h.b16 %v355
    %v445 = vunpack.c.l.b16 %v356
    %v446 = vunpack.c.l.b16 %v357
    %v447 = vunpack.c.h.b16 %v357
    %v448 = vunpack.c.l.b16 %v358
    %v449 = vpack.c.b16 %v404, %v401
    %v450 = vpack.c.b16 %v405, %v402
    %v451 = vpack.c.b16 %v406, %v403
    %v452 = vpack.c.b16 %v410, %v407
    %v453 = vpack.c.b16 %v411, %v408
    %v454 = vpack.c.b16 %v412, %v409
    %v455 = vpack.c.b16 %v416, %v413
    %v456 = vpack.c.b16 %v417, %v414
    %v457 = vpack.c.b16 %v418, %v415
    %v458 = vpack.c.b16 %v422, %v419
    %v459 = vpack.c.b16 %v423, %v420
    %v460 = vpack.c.b16 %v424, %v421
    %v461 = vpack.c.b16 %v428, %v425
    %v462 = vpack.c.b16 %v429, %v426
    %v463 = vpack.c.b16 %v430, %v427
    %v464 = vpack.c.b16 %v434, %v431
    %v465 = vpack.c.b16 %v435, %v432
    %v466 = vpack.c.b16 %v436, %v433
    %v467 = vpack.c.b16 %v440, %v437
    %v468 = vpack.c.b16 %v441, %v438
    %v469 = vpack.c.b16 %v442, %v439
    %v470 = vpack.c.b16 %v446, %v443
    %v471 = vpack.c.b16 %v447, %v444
    %v472 = vpack.c.b16 %v448, %v445
    %497 = vmatpush.bf16.msra.mxu0 %v470
    %498 = vmatpush.bf16.msra.mxu0 %v467
    %499 = vmatpush.bf16.msra.mxu0 %v464
    %500 = vmatpush.bf16.msra.mxu0 %v461
    %501 = vmatpush.bf16.msra.mxu0 %v458
    %502 = vmatpush.bf16.msra.mxu0 %v455
    %503 = vmatpush.bf16.msra.mxu0 %v452
    %504 = vmatpush.bf16.msra.mxu0 %v449
    %505 = vmatmul.bf16.gmra.mxu0 %v361
    %v506 = vpop.f32.mrf.mxu0
    %v507 = vadd.f32 %v363, %v506
    %v508 = vpop.f32.mrf.mxu0
    %v509 = vadd.f32 %v363, %v508
    %510 = vdwg.mxu0
    %511 = vmatpush.bf16.msra.mxu0 %v471
    %512 = vmatpush.bf16.msra.mxu0 %v468
    %513 = vmatpush.bf16.msra.mxu0 %v465
    %514 = vmatpush.bf16.msra.mxu0 %v462
    %515 = vmatpush.bf16.msra.mxu0 %v459
    %516 = vmatpush.bf16.msra.mxu0 %v456
    %517 = vmatpush.bf16.msra.mxu0 %v453
    %518 = vmatpush.bf16.msra.mxu0 %v450
    %519 = vmatmul.bf16.gmra.mxu0 %v361
    %v520 = vpop.f32.mrf.mxu0
    %v521 = vadd.f32 %v364, %v520
    %v522 = vpop.f32.mrf.mxu0
    %v523 = vadd.f32 %v364, %v522
    %524 = vdwg.mxu0
    %525 = vmatpush.bf16.msra.mxu0 %v472
    %526 = vmatpush.bf16.msra.mxu0 %v469
    %527 = vmatpush.bf16.msra.mxu0 %v466
    %528 = vmatpush.bf16.msra.mxu0 %v463
    %529 = vmatpush.bf16.msra.mxu0 %v460
    %530 = vmatpush.bf16.msra.mxu0 %v457
    %531 = vmatpush.bf16.msra.mxu0 %v454
    %532 = vmatpush.bf16.msra.mxu0 %v451
    %533 = vmatmul.bf16.gmra.mxu0 %v361
    %v534 = vpop.f32.mrf.mxu0
    %v535 = vadd.f32 %v365, %v534
    %v536 = vpop.f32.mrf.mxu0
    %v537 = vadd.f32 %v365, %v536
    %538 = vdwg.mxu0
    %v539 = vxor.u32 %v507, 2147483648
    %v540 = vxor.u32 %v509, 2147483648
    %v541 = vmul.f32 %v539, 1.442695
    %v542 = vpow.pop %v541
    %v543 = vmul.f32 %v540, 1.442695
    %v544 = vpow.pop %v543
    %v545 = vadd.f32 %v542, 1.0
    %v546 = vadd.f32 %v544, 1.0
    %v547 = vrcp.pop %v545
    %v548 = vmul.f32 %v545, %v547
    %v549 = vsub.f32 1.0, %v548
    %v550 = vmul.f32 %v547, %v549
    %v551 = vadd.f32 %v547, %v550
    %vm552 = vweird.f32 %v545
    %vm553 = vweird.f32 %v547
    %vm554 = vmor %vm552, %vm553
    %v555 = vsel %vm554, %v547, %v551
    %v556 = vand.u32 2147483647, %v545
    %vm557 = vcmp.eq.f32.partialorder %v556, 8.507059e+37
    %v558 = vand.u32 %v545, 2147483648
    %v559 = vor.u32 1.1754944e-38, %v558
    %v560 = vsel %vm557, %v559, %v555
    %v561 = vmul.f32 1.0, %v560
    %v562 = vrcp.pop %v546
    %v563 = vmul.f32 %v546, %v562
    %v564 = vsub.f32 1.0, %v563
    %v565 = vmul.f32 %v562, %v564
    %v566 = vadd.f32 %v562, %v565
    %vm567 = vweird.f32 %v546
    %vm568 = vweird.f32 %v562
    %vm569 = vmor %vm567, %vm568
    %v570 = vsel %vm569, %v562, %v566
    %v571 = vand.u32 2147483647, %v546
    %vm572 = vcmp.eq.f32.partialorder %v571, 8.507059e+37
    %v573 = vand.u32 %v546, 2147483648
    %v574 = vor.u32 1.1754944e-38, %v573
    %v575 = vsel %vm572, %v574, %v570
    %v576 = vmul.f32 1.0, %v575
    %v577 = vmax.f32 %v521, 0.0
    %v578 = vmax.f32 %v523, 0.0
    %v579 = vsub.f32 %v577, %v535
    %v580 = vsub.f32 %v578, %v537
    %v581 = vmul.f32 %v561, %v579
    %v582 = vmul.f32 %v576, %v580
    %v583 = vadd.f32 %v581, %v535
    %v584 = vadd.f32 %v582, %v537
    %585 = vst [vmem:[#allocation8] sm:$0xff] %v583
    %586 = vst [vmem:[#allocation8 + $0x8] sm:$0xff] %v584
    // Predicated region
    $region26: #{tpu_custom_call.1} parent=1 // pred_check
      _
    $region27: #{tpu_custom_call.1} parent=1 // pred_check_branch
      %588 = sbr.rel (0) target = $region29
    $region28: #{tpu_custom_call.1} parent=1 // pred_region
      %590 = vsyncadd [#allocation4], 0
      %s591 = sshll.u32 [#allocation8], 4
      %s592 = int_to_ptr.vmem [resolvable:$true] %s591
      %s593 = sshll.u32 %s3, 4
      %s594 = int_to_ptr.hbm [resolvable:$true] %s593
      %599 = dma.vmem_to_hbm [thread:$0]  %s592, 256, %s594, [#allocation4], 128, 128, 8
    $region29: #{tpu_custom_call.1} parent=1 // pred_fallthru
      _
    // Predicated region
    $region30: #{tpu_custom_call.1} parent=1 // pred_check
      _
    $region31: #{tpu_custom_call.1} parent=1 // pred_check_branch
      %601 = sbr.rel (0) target = $region33
    $region32: #{tpu_custom_call.1} parent=1 // pred_region
      %603 = dma.done [#allocation4], 256
    $region33: #{tpu_custom_call.1} parent=1 // pred_fallthru
      _
    %604 = vsyncpa [#allocation3], 1
    %605 = vsyncpa [#allocation6], 1
    %606 = vsyncpa [#allocation4], 1

</llo_original>
